<compile_context>
chip_gen: v7x
topology: tpu7x:2x2x1
jax: 0.10.0
libtpu: 0.0.40
codegen_flags: <defaults>
</compile_context>

<pallas_src>
import functools

import jax
import jax.numpy as jnp
from jax.experimental import pallas as pl
from jax.experimental.pallas import tpu as pltpu


def _round_up(x, m):
    return ((x + m - 1) // m) * m


def _fused_mlp_kernel(x_ref, *refs, n_layers):
    """Fused MLP tile: h = x; repeat {h = relu(h @ W + b)}; out = h @ Wn + bn.

    refs = (w1, b1, w2, b2, ..., wn, bn, o_ref).
    x / W are bf16 (MXU-native); accumulation, bias and ReLU are f32.
    """
    w_refs = refs[0:2 * n_layers:2]
    b_refs = refs[1:2 * n_layers:2]
    o_ref = refs[2 * n_layers]

    h = x_ref[...]                                         # bf16 (bm, d0_pad)
    y = None
    for li in range(n_layers):
        y = jnp.dot(h, w_refs[li][...],
                    preferred_element_type=jnp.float32)    # MXU, f32 acc
        y = y + b_refs[li][...]                            # (1, d) broadcast, f32
        if li < n_layers - 1:
            y = jnp.maximum(y, 0.0)                        # ReLU (f32, VPU)
            # Dropout: inference path (training=False) -> identity.
            h = y.astype(jnp.bfloat16)                     # bf16 feed for next MXU pass
    o_ref[...] = y.astype(o_ref.dtype)                     # lane-dense f32 store


def _pad2(a, rows, cols, dtype):
    a = a.astype(dtype)
    return jnp.pad(a, ((0, rows - a.shape[0]), (0, cols - a.shape[1])))


def my_mlp_forward(features, params, *, bm=256, lane=128):
    """Forward pass of My_MLP (inference; dropout is identity).

    features: [B, in_dim] f32
    params:   list of (W [in, out] f32, b [1, out] f32)  (W transposed vs torch)
    """
    B, in_dim = features.shape
    n_layers = len(params)
    dims = [in_dim] + [w.shape[1] for (w, _) in params]
    pdims = [_round_up(d, lane) for d in dims]             # lane-dense feature dims

    # Batch tiling: cap the tile at the (8-rounded) batch, pad batch to a tile multiple.
    bm = min(bm, _round_up(B, 8))
    B_pad = _round_up(B, bm)
    grid = (B_pad // bm,)

    # Zero-pad + cast. Zero pad rows/cols are mathematically inert
    # (zero activations x zero weight rows; padded outputs stay 0 through ReLU).
    x_p = _pad2(features, B_pad, pdims[0], jnp.bfloat16)
    flat_wb = []
    in_specs = [pl.BlockSpec((bm, pdims[0]), lambda i: (i, 0))]
    for li, (w, b) in enumerate(params):
        w_p = _pad2(w, pdims[li], pdims[li + 1], jnp.bfloat16)   # bf16 weights (resident)
        b_p = _pad2(b, 1, pdims[li + 1], jnp.float32)            # f32 bias
        flat_wb += [w_p, b_p]
        # Weights/biases: same block for every grid step -> stay resident in VMEM.
        in_specs.append(pl.BlockSpec(w_p.shape, lambda i: (0, 0)))
        in_specs.append(pl.BlockSpec(b_p.shape, lambda i: (0, 0)))

    out = pl.pallas_call(
        functools.partial(_fused_mlp_kernel, n_layers=n_layers),
        out_shape=jax.ShapeDtypeStruct((B_pad, pdims[-1]), jnp.float32),
        grid_spec=pltpu.PrefetchScalarGridSpec(
            num_scalar_prefetch=0,
            grid=grid,
            in_specs=in_specs,
            out_specs=pl.BlockSpec((bm, pdims[-1]), lambda i: (i, 0)),
        ),
        compiler_params=pltpu.CompilerParams(
            dimension_semantics=("parallel",)),
    )(x_p, *flat_wb)

    return out[:B, :dims[-1]]


def init_mlp_params(key, n_layers, in_dim, hidden, out_dim):
    """Matches the PyTorch module:
       weights: xavier_uniform with gain = calculate_gain('relu') = sqrt(2)
       biases:  PyTorch Linear default uniform(-1/sqrt(fan_in), 1/sqrt(fan_in))."""
    dims = [in_dim] + [hidden] * (n_layers - 1) + [out_dim]
    gain = jnp.sqrt(2.0)
    params = []
    for li in range(n_layers):
        fan_in, fan_out = dims[li], dims[li + 1]
        key, wk, bk = jax.random.split(key, 3)
        w_bound = gain * jnp.sqrt(6.0 / (fan_in + fan_out))
        # stored as [in, out] (transposed vs torch's [out, in])
        w = jax.random.uniform(wk, (fan_in, fan_out), jnp.float32,
                               minval=-w_bound, maxval=w_bound)
        b_bound = 1.0 / jnp.sqrt(fan_in)
        b = jax.random.uniform(bk, (1, fan_out), jnp.float32,
                               minval=-b_bound, maxval=b_bound)
        params.append((w, b))
    return params


if __name__ == "__main__":
    # Small shapes consistent with the module: n_layers=3 MLP.
    n_layers, in_dim, hidden, out_dim = 3, 16, 32, 8
    batch = 200          # ragged (not a multiple of bm) -> exercises padding
    dropout = 0.5        # unused at inference

    key = jax.random.PRNGKey(0)
    key, xk = jax.random.split(key)
    x = jax.random.normal(xk, (batch, in_dim), jnp.float32)

    params = init_mlp_params(key, n_layers, in_dim, hidden, out_dim)

    fwd = jax.jit(my_mlp_forward, static_argnames=("bm", "lane"))
    out = fwd(x, params)
    out = jax.block_until_ready(out)
    assert out.shape == (batch, out_dim), out.shape

    # Reference with the same bf16-matmul / f32-accumulate numerics.
    ref = x
    for (w, b) in params[:-1]:
        ref = jnp.dot(ref.astype(jnp.bfloat16), w.astype(jnp.bfloat16),
                      preferred_element_type=jnp.float32) + b
        ref = jnp.maximum(ref, 0.0)
    w, b = params[-1]
    ref = jnp.dot(ref.astype(jnp.bfloat16), w.astype(jnp.bfloat16),
                  preferred_element_type=jnp.float32) + b
    assert jnp.allclose(out, ref, atol=1e-3, rtol=1e-3)

    # Loose sanity check against the pure-f32 math as well.
    ref32 = x
    for (w, b) in params[:-1]:
        ref32 = jnp.maximum(ref32 @ w + b, 0.0)
    ref32 = ref32 @ params[-1][0] + params[-1][1]
    assert jnp.allclose(out, ref32, atol=5e-2, rtol=5e-2)

    print("KERNEL_OK")
</pallas_src>

<mosaic_0001>
module attributes {stable_mosaic.version = 11 : i64} {
  func.func @_fused_mlp_kernel(%arg0: i32, %arg1: memref<200x128xbf16, #tpu.memory_space<vmem>>, %arg2: memref<128x128xbf16, #tpu.memory_space<vmem>>, %arg3: memref<1x128xf32, #tpu.memory_space<vmem>>, %arg4: memref<128x128xbf16, #tpu.memory_space<vmem>>, %arg5: memref<1x128xf32, #tpu.memory_space<vmem>>, %arg6: memref<128x128xbf16, #tpu.memory_space<vmem>>, %arg7: memref<1x128xf32, #tpu.memory_space<vmem>>, %arg8: memref<200x128xf32, #tpu.memory_space<vmem>>) attributes {dimension_semantics = [#tpu.dimension_semantics<parallel>], iteration_bounds = array<i64: 1>, scalar_prefetch = 0 : i64, scratch_operands = 0 : i64, tpu.core_type = #tpu.core_type<tc>, window_params = [{transform_indices = @transform_0, window_bounds = array<i64: 200, 128>}, {pipeline_mode = #tpu.pipeline_mode<synchronous>, transform_indices = @transform_1, window_bounds = array<i64: 128, 128>}, {pipeline_mode = #tpu.pipeline_mode<synchronous>, transform_indices = @transform_2, window_bounds = array<i64: 1, 128>}, {pipeline_mode = #tpu.pipeline_mode<synchronous>, transform_indices = @transform_3, window_bounds = array<i64: 128, 128>}, {pipeline_mode = #tpu.pipeline_mode<synchronous>, transform_indices = @transform_4, window_bounds = array<i64: 1, 128>}, {pipeline_mode = #tpu.pipeline_mode<synchronous>, transform_indices = @transform_5, window_bounds = array<i64: 128, 128>}, {pipeline_mode = #tpu.pipeline_mode<synchronous>, transform_indices = @transform_6, window_bounds = array<i64: 1, 128>}, {transform_indices = @transform_7, window_bounds = array<i64: 200, 128>}]} {
    %c0 = arith.constant 0 : index
    %c0_0 = arith.constant 0 : index
    %0 = vector.load %arg1[%c0, %c0_0] : memref<200x128xbf16, #tpu.memory_space<vmem>>, vector<200x128xbf16>
    %c0_1 = arith.constant 0 : index
    %c0_2 = arith.constant 0 : index
    %1 = vector.load %arg2[%c0_1, %c0_2] : memref<128x128xbf16, #tpu.memory_space<vmem>>, vector<128x128xbf16>
    %cst = arith.constant dense<0.000000e+00> : vector<200x128xf32>
    %2 = tpu.matmul %0, %1, %cst {dimension_numbers = #tpu.dot_dimension_numbers<[1], [0], [0], [1], [0, 0, 1, 1], [], []>} : vector<200x128xbf16>, vector<128x128xbf16>, vector<200x128xf32> -> vector<200x128xf32>
    %c0_3 = arith.constant 0 : index
    %c0_4 = arith.constant 0 : index
    %3 = vector.load %arg3[%c0_3, %c0_4] : memref<1x128xf32, #tpu.memory_space<vmem>>, vector<1x128xf32>
    %4 = vector.broadcast %3 : vector<1x128xf32> to vector<200x128xf32>
    %5 = arith.addf %2, %4 : vector<200x128xf32>
    %cst_5 = arith.constant 0.000000e+00 : f32
    %6 = vector.broadcast %cst_5 : f32 to vector<200x128xf32>
    %7 = arith.maximumf %5, %6 : vector<200x128xf32>
    %8 = arith.truncf %7 : vector<200x128xf32> to vector<200x128xbf16>
    %c0_6 = arith.constant 0 : index
    %c0_7 = arith.constant 0 : index
    %9 = vector.load %arg4[%c0_6, %c0_7] : memref<128x128xbf16, #tpu.memory_space<vmem>>, vector<128x128xbf16>
    %cst_8 = arith.constant dense<0.000000e+00> : vector<200x128xf32>
    %10 = tpu.matmul %8, %9, %cst_8 {dimension_numbers = #tpu.dot_dimension_numbers<[1], [0], [0], [1], [0, 0, 1, 1], [], []>} : vector<200x128xbf16>, vector<128x128xbf16>, vector<200x128xf32> -> vector<200x128xf32>
    %c0_9 = arith.constant 0 : index
    %c0_10 = arith.constant 0 : index
    %11 = vector.load %arg5[%c0_9, %c0_10] : memref<1x128xf32, #tpu.memory_space<vmem>>, vector<1x128xf32>
    %12 = vector.broadcast %11 : vector<1x128xf32> to vector<200x128xf32>
    %13 = arith.addf %10, %12 : vector<200x128xf32>
    %cst_11 = arith.constant 0.000000e+00 : f32
    %14 = vector.broadcast %cst_11 : f32 to vector<200x128xf32>
    %15 = arith.maximumf %13, %14 : vector<200x128xf32>
    %16 = arith.truncf %15 : vector<200x128xf32> to vector<200x128xbf16>
    %c0_12 = arith.constant 0 : index
    %c0_13 = arith.constant 0 : index
    %17 = vector.load %arg6[%c0_12, %c0_13] : memref<128x128xbf16, #tpu.memory_space<vmem>>, vector<128x128xbf16>
    %cst_14 = arith.constant dense<0.000000e+00> : vector<200x128xf32>
    %18 = tpu.matmul %16, %17, %cst_14 {dimension_numbers = #tpu.dot_dimension_numbers<[1], [0], [0], [1], [0, 0, 1, 1], [], []>} : vector<200x128xbf16>, vector<128x128xbf16>, vector<200x128xf32> -> vector<200x128xf32>
    %c0_15 = arith.constant 0 : index
    %c0_16 = arith.constant 0 : index
    %19 = vector.load %arg7[%c0_15, %c0_16] : memref<1x128xf32, #tpu.memory_space<vmem>>, vector<1x128xf32>
    %20 = vector.broadcast %19 : vector<1x128xf32> to vector<200x128xf32>
    %21 = arith.addf %18, %20 : vector<200x128xf32>
    %c0_17 = arith.constant 0 : index
    %c0_18 = arith.constant 0 : index
    %22 = vector.load %arg8[%c0_17, %c0_18] : memref<200x128xf32, #tpu.memory_space<vmem>>, vector<200x128xf32>
    tpu.vector_store %arg8[%c0_17, %c0_18], %21 {strides = array<i32>} : memref<200x128xf32, #tpu.memory_space<vmem>>, vector<200x128xf32>,
    return
  }
  func.func @transform_0(%arg0: i32) -> (i32, i32) {
    %c0_i32 = arith.constant 0 : i32
    %c0_i32_0 = arith.constant 0 : i32
    return %arg0, %c0_i32 : i32, i32
  }
  func.func @transform_1(%arg0: i32) -> (i32, i32) {
    %c0_i32 = arith.constant 0 : i32
    %c0_i32_0 = arith.constant 0 : i32
    %c0_i32_1 = arith.constant 0 : i32
    return %c0_i32, %c0_i32_0 : i32, i32
  }
  func.func @transform_2(%arg0: i32) -> (i32, i32) {
    %c0_i32 = arith.constant 0 : i32
    %c0_i32_0 = arith.constant 0 : i32
    %c0_i32_1 = arith.constant 0 : i32
    return %c0_i32, %c0_i32_0 : i32, i32
  }
  func.func @transform_3(%arg0: i32) -> (i32, i32) {
    %c0_i32 = arith.constant 0 : i32
    %c0_i32_0 = arith.constant 0 : i32
    %c0_i32_1 = arith.constant 0 : i32
    return %c0_i32, %c0_i32_0 : i32, i32
  }
  func.func @transform_4(%arg0: i32) -> (i32, i32) {
    %c0_i32 = arith.constant 0 : i32
    %c0_i32_0 = arith.constant 0 : i32
    %c0_i32_1 = arith.constant 0 : i32
    return %c0_i32, %c0_i32_0 : i32, i32
  }
  func.func @transform_5(%arg0: i32) -> (i32, i32) {
    %c0_i32 = arith.constant 0 : i32
    %c0_i32_0 = arith.constant 0 : i32
    %c0_i32_1 = arith.constant 0 : i32
    return %c0_i32, %c0_i32_0 : i32, i32
  }
  func.func @transform_6(%arg0: i32) -> (i32, i32) {
    %c0_i32 = arith.constant 0 : i32
    %c0_i32_0 = arith.constant 0 : i32
    %c0_i32_1 = arith.constant 0 : i32
    return %c0_i32, %c0_i32_0 : i32, i32
  }
  func.func @transform_7(%arg0: i32) -> (i32, i32) {
    %c0_i32 = arith.constant 0 : i32
    %c0_i32_0 = arith.constant 0 : i32
    return %arg0, %c0_i32 : i32, i32
  }
}

</mosaic_0001>

<llo_original>
// kernel: my_mlp_forward.1
$region0: #{my_mlp_forward.1}
  #allocation0 [shape = 'u32[]', space=smem, size = 0x4, offset = 0x4, fixed_abs, tag = 'smem constant byte address 0x4 - core index']
  #allocation1 [shape = 'u32[144,128]{1,0:T(1,128)}', space=vmem, size = 0x12000, scoped, tag = 'internal scratch']
  %s0 = inlined_call_operand.vmem [shape: bf16[200,128], index: 0, kind: input, shape index: {}]
  %s1 = inlined_call_operand.vmem [shape: bf16[128,128], index: 1, kind: input, shape index: {}]
  %s2 = inlined_call_operand.vmem [shape: f32[1,128], index: 2, kind: input, shape index: {}]
  %s3 = inlined_call_operand.vmem [shape: bf16[128,128], index: 3, kind: input, shape index: {}]
  %s4 = inlined_call_operand.vmem [shape: f32[1,128], index: 4, kind: input, shape index: {}]
  %s5 = inlined_call_operand.vmem [shape: bf16[128,128], index: 5, kind: input, shape index: {}]
  %s6 = inlined_call_operand.vmem [shape: f32[1,128], index: 6, kind: input, shape index: {}]
  %s7 = inlined_call_operand.vmem [shape: f32[200,128], index: 7, kind: output, shape index: {}]
  %s8 = sld [smem:[#allocation0]]
  $region38: #{my_mlp_forward.1} parent=0
    _
  %s10 = ssub.s32 1, %s8
  %s11 = scalar_select 0, %s10, %s8
  // Predicated region
  $region2: #{my_mlp_forward.1} parent=0 // pred_check
    _
  $region3: #{my_mlp_forward.1} parent=0 // pred_check_branch
    %13 = sbr.rel (0) target = $region5
  $region4: #{my_mlp_forward.1} parent=0 // pred_region
    _
  $region5: #{my_mlp_forward.1} parent=0 // pred_fallthru
    _
  // Predicated region
  $region6: #{my_mlp_forward.1} parent=0 // pred_check
    _
  $region7: #{my_mlp_forward.1} parent=0 // pred_check_branch
    %15 = sbr.rel (0) target = $region9
  $region8: #{my_mlp_forward.1} parent=0 // pred_region
    _
  $region9: #{my_mlp_forward.1} parent=0 // pred_fallthru
    _
  // Predicated region
  $region10: #{my_mlp_forward.1} parent=0 // pred_check
    _
  $region11: #{my_mlp_forward.1} parent=0 // pred_check_branch
    %17 = sbr.rel (0) target = $region13
  $region12: #{my_mlp_forward.1} parent=0 // pred_region
    _
  $region13: #{my_mlp_forward.1} parent=0 // pred_fallthru
    _
  // Predicated region
  $region14: #{my_mlp_forward.1} parent=0 // pred_check
    _
  $region15: #{my_mlp_forward.1} parent=0 // pred_check_branch
    %19 = sbr.rel (0) target = $region17
  $region16: #{my_mlp_forward.1} parent=0 // pred_region
    _
  $region17: #{my_mlp_forward.1} parent=0 // pred_fallthru
    _
  // Predicated region
  $region18: #{my_mlp_forward.1} parent=0 // pred_check
    _
  $region19: #{my_mlp_forward.1} parent=0 // pred_check_branch
    %21 = sbr.rel (0) target = $region21
  $region20: #{my_mlp_forward.1} parent=0 // pred_region
    _
  $region21: #{my_mlp_forward.1} parent=0 // pred_fallthru
    _
  // Predicated region
  $region22: #{my_mlp_forward.1} parent=0 // pred_check
    _
  $region23: #{my_mlp_forward.1} parent=0 // pred_check_branch
    %23 = sbr.rel (0) target = $region25
  $region24: #{my_mlp_forward.1} parent=0 // pred_region
    _
  $region25: #{my_mlp_forward.1} parent=0 // pred_fallthru
    _
  // Predicated region
  $region26: #{my_mlp_forward.1} parent=0 // pred_check
    _
  $region27: #{my_mlp_forward.1} parent=0 // pred_check_branch
    %25 = sbr.rel (0) target = $region29
  $region28: #{my_mlp_forward.1} parent=0 // pred_region
    _
  $region29: #{my_mlp_forward.1} parent=0 // pred_fallthru
    _
  %v27 = vld [vmem:[%s0] sm:$0xf]
  %v28 = vld [vmem:[%s0 + $0x4] sm:$0xf]
  %v29 = vld [vmem:[%s0 + $0x8] sm:$0xf]
  %v30 = vld [vmem:[%s0 + $0xc] sm:$0xf]
  %v31 = vld [vmem:[%s0 + $0x10] sm:$0xf]
  %v32 = vld [vmem:[%s0 + $0x14] sm:$0xf]
  %v33 = vld [vmem:[%s0 + $0x18] sm:$0xf]
  %v34 = vld [vmem:[%s0 + $0x1c] sm:$0xf]
  %v35 = vld [vmem:[%s0 + $0x20] sm:$0xf]
  %v36 = vld [vmem:[%s0 + $0x24] sm:$0xf]
  %v37 = vld [vmem:[%s0 + $0x28] sm:$0xf]
  %v38 = vld [vmem:[%s0 + $0x2c] sm:$0xf]
  %v39 = vld [vmem:[%s0 + $0x30] sm:$0xf]
  %v40 = vld [vmem:[%s0 + $0x34] sm:$0xf]
  %v41 = vld [vmem:[%s0 + $0x38] sm:$0xf]
  %v42 = vld [vmem:[%s0 + $0x3c] sm:$0xf]
  %v43 = vld [vmem:[%s0 + $0x40] sm:$0xf]
  %v44 = vld [vmem:[%s0 + $0x44] sm:$0xf]
  %v45 = vld [vmem:[%s0 + $0x48] sm:$0xf]
  %v46 = vld [vmem:[%s0 + $0x4c] sm:$0xf]
  %v47 = vld [vmem:[%s0 + $0x50] sm:$0xf]
  %v48 = vld [vmem:[%s0 + $0x54] sm:$0xf]
  %v49 = vld [vmem:[%s0 + $0x58] sm:$0xf]
  %v50 = vld [vmem:[%s0 + $0x5c] sm:$0xf]
  %v51 = vld [vmem:[%s0 + $0x60] sm:$0xf]
  %v52 = vld [vmem:[%s1] sm:$0xf]
  %v53 = vld [vmem:[%s1 + $0x4] sm:$0xf]
  %v54 = vld [vmem:[%s1 + $0x8] sm:$0xf]
  %v55 = vld [vmem:[%s1 + $0xc] sm:$0xf]
  %v56 = vld [vmem:[%s1 + $0x10] sm:$0xf]
  %v57 = vld [vmem:[%s1 + $0x14] sm:$0xf]
  %v58 = vld [vmem:[%s1 + $0x18] sm:$0xf]
  %v59 = vld [vmem:[%s1 + $0x1c] sm:$0xf]
  %v60 = vld [vmem:[%s1 + $0x20] sm:$0xf]
  %v61 = vld [vmem:[%s1 + $0x24] sm:$0xf]
  %v62 = vld [vmem:[%s1 + $0x28] sm:$0xf]
  %v63 = vld [vmem:[%s1 + $0x2c] sm:$0xf]
  %v64 = vld [vmem:[%s1 + $0x30] sm:$0xf]
  %v65 = vld [vmem:[%s1 + $0x34] sm:$0xf]
  %v66 = vld [vmem:[%s1 + $0x38] sm:$0xf]
  %v67 = vld [vmem:[%s1 + $0x3c] sm:$0xf]
  %v68 = vld [vmem:[%s2] sm:$0x1]
  %v70 = vlaneseq
  %v71 = vshrl.u32 %v70, 7
  %v72 = vsub.s32 0, %v71
  %v73 = vrot.slane %v68, %v72
  %v100 = vunpack.c.l.b16 %v27
  %v101 = vunpack.c.l.b16 %v28
  %v102 = vunpack.c.l.b16 %v29
  %v103 = vunpack.c.l.b16 %v30
  %v104 = vunpack.c.l.b16 %v31
  %v105 = vunpack.c.l.b16 %v32
  %v106 = vunpack.c.l.b16 %v33
  %v107 = vunpack.c.l.b16 %v34
  %v108 = vunpack.c.l.b16 %v35
  %v109 = vunpack.c.l.b16 %v36
  %v110 = vunpack.c.l.b16 %v37
  %v111 = vunpack.c.l.b16 %v38
  %v112 = vunpack.c.l.b16 %v39
  %v113 = vunpack.c.l.b16 %v40
  %v114 = vunpack.c.l.b16 %v41
  %v115 = vunpack.c.l.b16 %v42
  %v116 = vunpack.c.l.b16 %v43
  %v117 = vunpack.c.l.b16 %v44
  %v118 = vunpack.c.l.b16 %v45
  %v119 = vunpack.c.l.b16 %v46
  %v120 = vunpack.c.l.b16 %v47
  %v121 = vunpack.c.l.b16 %v48
  %v122 = vunpack.c.l.b16 %v49
  %v123 = vunpack.c.l.b16 %v50
  %v124 = vunpack.c.l.b16 %v51
  %v125 = vpack.c.b16 %v101, %v100
  %v126 = vpack.c.b16 %v103, %v102
  %v127 = vpack.c.b16 %v105, %v104
  %v128 = vpack.c.b16 %v107, %v106
  %v129 = vpack.c.b16 %v109, %v108
  %v130 = vpack.c.b16 %v111, %v110
  %v131 = vpack.c.b16 %v113, %v112
  %v132 = vpack.c.b16 %v115, %v114
  %v133 = vpack.c.b16 %v117, %v116
  %v134 = vpack.c.b16 %v119, %v118
  %v135 = vpack.c.b16 %v121, %v120
  %v136 = vpack.c.b16 %v123, %v122
  %v137 = vpack.c.b16 %v124, %v124
  %v167 = vunpack.c.l.b16 %v52
  %v168 = vunpack.c.l.b16 %v53
  %v169 = vunpack.c.l.b16 %v54
  %v170 = vunpack.c.l.b16 %v55
  %v171 = vunpack.c.l.b16 %v56
  %v172 = vunpack.c.l.b16 %v57
  %v173 = vunpack.c.l.b16 %v58
  %v174 = vunpack.c.l.b16 %v59
  %v175 = vunpack.c.l.b16 %v60
  %v176 = vunpack.c.l.b16 %v61
  %v177 = vunpack.c.l.b16 %v62
  %v178 = vunpack.c.l.b16 %v63
  %v179 = vunpack.c.l.b16 %v64
  %v180 = vunpack.c.l.b16 %v65
  %v181 = vunpack.c.l.b16 %v66
  %v182 = vunpack.c.l.b16 %v67
  %v183 = vpack.c.b16 %v168, %v167
  %v184 = vpack.c.b16 %v170, %v169
  %v185 = vpack.c.b16 %v172, %v171
  %v186 = vpack.c.b16 %v174, %v173
  %v187 = vpack.c.b16 %v176, %v175
  %v188 = vpack.c.b16 %v178, %v177
  %v189 = vpack.c.b16 %v180, %v179
  %v190 = vpack.c.b16 %v182, %v181
  %199 = vmatprep.subr.bf16.mxu0 0
  %200 = vmatpush1.bf16.msra.mxu0 %v183
  %201 = vmatprep.subr.bf16.mxu0 0
  %202 = vmatpush1.bf16.msra.mxu0 %v184
  %203 = vmatprep.subr.bf16.mxu0 0
  %204 = vmatpush1.bf16.msra.mxu0 %v185
  %205 = vmatprep.subr.bf16.mxu0 0
  %206 = vmatpush1.bf16.msra.mxu0 %v186
  %207 = vmatprep.subr.bf16.mxu0 0
  %208 = vmatpush1.bf16.msra.mxu0 %v187
  %209 = vmatprep.subr.bf16.mxu0 0
  %210 = vmatpush1.bf16.msra.mxu0 %v188
  %211 = vmatprep.subr.bf16.mxu0 0
  %212 = vmatpush1.bf16.msra.mxu0 %v189
  %213 = vmatprep.subr.bf16.mxu0 0
  %214 = vmatpush1.bf16.msra.mxu0 %v190
  %215 = vmatprep.subr.bf16.mxu0 0
  %216 = vmatpush1.bf16.msra.mxu0 0
  %217 = vmatprep.subr.bf16.mxu0 0
  %218 = vmatpush1.bf16.msra.mxu0 0
  %219 = vmatprep.subr.bf16.mxu0 0
  %220 = vmatpush1.bf16.msra.mxu0 0
  %221 = vmatprep.subr.bf16.mxu0 0
  %222 = vmatpush1.bf16.msra.mxu0 0
  %223 = vmatprep.subr.bf16.mxu0 0
  %224 = vmatpush1.bf16.msra.mxu0 0
  %225 = vmatprep.subr.bf16.mxu0 0
  %226 = vmatpush1.bf16.msra.mxu0 0
  %227 = vmatprep.subr.bf16.mxu0 0
  %228 = vmatpush1.bf16.msra.mxu0 0
  %229 = vmatprep.subr.bf16.mxu0 0
  %230 = vmatpush1.bf16.msra.mxu0 0
  %231 = vmatprep.mubr.bf16.mxu0 0
  %232 = vmatmul.mubr.bf16.gmra.mrb[0].mxu0 %v125
  %v233 = vpop.f32.mrb[0].mxu0
  %v234 = vadd.f32 %v73, %v233
  %v235 = vpop.f32.mrb[0].mxu0
  %v236 = vpop.f32.mrb[0].mxu0
  %v237 = vadd.f32 %v73, %v236
  %v238 = vpop.f32.mrb[0].mxu0
  %239 = vmatprep.mubr.bf16.mxu0 0
  %240 = vmatmul.mubr.bf16.gmra.mrb[0].mxu0 %v126
  %v241 = vpop.f32.mrb[0].mxu0
  %v242 = vadd.f32 %v73, %v241
  %v243 = vpop.f32.mrb[0].mxu0
  %v244 = vpop.f32.mrb[0].mxu0
  %v245 = vadd.f32 %v73, %v244
  %v246 = vpop.f32.mrb[0].mxu0
  %247 = vmatprep.mubr.bf16.mxu0 0
  %248 = vmatmul.mubr.bf16.gmra.mrb[0].mxu0 %v127
  %v249 = vpop.f32.mrb[0].mxu0
  %v250 = vadd.f32 %v73, %v249
  %v251 = vpop.f32.mrb[0].mxu0
  %v252 = vpop.f32.mrb[0].mxu0
  %v253 = vadd.f32 %v73, %v252
  %v254 = vpop.f32.mrb[0].mxu0
  %255 = vmatprep.mubr.bf16.mxu0 0
  %256 = vmatmul.mubr.bf16.gmra.mrb[0].mxu0 %v128
  %v257 = vpop.f32.mrb[0].mxu0
  %v258 = vadd.f32 %v73, %v257
  %v259 = vpop.f32.mrb[0].mxu0
  %v260 = vpop.f32.mrb[0].mxu0
  %v261 = vadd.f32 %v73, %v260
  %v262 = vpop.f32.mrb[0].mxu0
  %263 = vmatprep.mubr.bf16.mxu0 0
  %264 = vmatmul.mubr.bf16.gmra.mrb[0].mxu0 %v129
  %v265 = vpop.f32.mrb[0].mxu0
  %v266 = vadd.f32 %v73, %v265
  %v267 = vpop.f32.mrb[0].mxu0
  %v268 = vpop.f32.mrb[0].mxu0
  %v269 = vadd.f32 %v73, %v268
  %v270 = vpop.f32.mrb[0].mxu0
  %271 = vmatprep.mubr.bf16.mxu0 0
  %272 = vmatmul.mubr.bf16.gmra.mrb[0].mxu0 %v130
  %v273 = vpop.f32.mrb[0].mxu0
  %v274 = vadd.f32 %v73, %v273
  %v275 = vpop.f32.mrb[0].mxu0
  %v276 = vpop.f32.mrb[0].mxu0
  %v277 = vadd.f32 %v73, %v276
  %v278 = vpop.f32.mrb[0].mxu0
  %279 = vmatprep.mubr.bf16.mxu0 0
  %280 = vmatmul.mubr.bf16.gmra.mrb[0].mxu0 %v131
  %v281 = vpop.f32.mrb[0].mxu0
  %v282 = vadd.f32 %v73, %v281
  %v283 = vpop.f32.mrb[0].mxu0
  %v284 = vpop.f32.mrb[0].mxu0
  %v285 = vadd.f32 %v73, %v284
  %v286 = vpop.f32.mrb[0].mxu0
  %287 = vmatprep.mubr.bf16.mxu0 0
  %288 = vmatmul.mubr.bf16.gmra.mrb[0].mxu0 %v132
  %v289 = vpop.f32.mrb[0].mxu0
  %v290 = vadd.f32 %v73, %v289
  %v291 = vpop.f32.mrb[0].mxu0
  %v292 = vpop.f32.mrb[0].mxu0
  %v293 = vadd.f32 %v73, %v292
  %v294 = vpop.f32.mrb[0].mxu0
  %295 = vmatprep.mubr.bf16.mxu0 0
  %296 = vmatmul.mubr.bf16.gmra.mrb[0].mxu0 %v133
  %v297 = vpop.f32.mrb[0].mxu0
  %v298 = vadd.f32 %v73, %v297
  %v299 = vpop.f32.mrb[0].mxu0
  %v300 = vpop.f32.mrb[0].mxu0
  %v301 = vadd.f32 %v73, %v300
  %v302 = vpop.f32.mrb[0].mxu0
  %303 = vmatprep.mubr.bf16.mxu0 0
  %304 = vmatmul.mubr.bf16.gmra.mrb[0].mxu0 %v134
  %v305 = vpop.f32.mrb[0].mxu0
  %v306 = vadd.f32 %v73, %v305
  %v307 = vpop.f32.mrb[0].mxu0
  %v308 = vpop.f32.mrb[0].mxu0
  %v309 = vadd.f32 %v73, %v308
  %v310 = vpop.f32.mrb[0].mxu0
  %311 = vmatprep.mubr.bf16.mxu0 0
  %312 = vmatmul.mubr.bf16.gmra.mrb[0].mxu0 %v135
  %v313 = vpop.f32.mrb[0].mxu0
  %v314 = vadd.f32 %v73, %v313
  %v315 = vpop.f32.mrb[0].mxu0
  %v316 = vpop.f32.mrb[0].mxu0
  %v317 = vadd.f32 %v73, %v316
  %v318 = vpop.f32.mrb[0].mxu0
  %319 = vmatprep.mubr.bf16.mxu0 0
  %320 = vmatmul.mubr.bf16.gmra.mrb[0].mxu0 %v136
  %v321 = vpop.f32.mrb[0].mxu0
  %v322 = vadd.f32 %v73, %v321
  %v323 = vpop.f32.mrb[0].mxu0
  %v324 = vpop.f32.mrb[0].mxu0
  %v325 = vadd.f32 %v73, %v324
  %v326 = vpop.f32.mrb[0].mxu0
  %327 = vmatprep.mubr.bf16.mxu0 0
  %328 = vmatmul.mubr.bf16.gmra.mrb[0].mxu0 %v137
  %v329 = vpop.f32.mrb[0].mxu0
  %v330 = vadd.f32 %v73, %v329
  %v331 = vpop.f32.mrb[0].mxu0
  %v332 = vpop.f32.mrb[0].mxu0
  %v333 = vpop.f32.mrb[0].mxu0
  %334 = vdwg.mxu0
  %v335 = vmax.f32 %v234, 0.0
  %v336 = vmax.f32 %v237, 0.0
  %v337 = vmax.f32 %v242, 0.0
  %v338 = vmax.f32 %v245, 0.0
  %v339 = vmax.f32 %v250, 0.0
  %v340 = vmax.f32 %v253, 0.0
  %v341 = vmax.f32 %v258, 0.0
  %v342 = vmax.f32 %v261, 0.0
  %v343 = vmax.f32 %v266, 0.0
  %v344 = vmax.f32 %v269, 0.0
  %v345 = vmax.f32 %v274, 0.0
  %v346 = vmax.f32 %v277, 0.0
  %v347 = vmax.f32 %v282, 0.0
  %v348 = vmax.f32 %v285, 0.0
  %v349 = vmax.f32 %v290, 0.0
  %v350 = vmax.f32 %v293, 0.0
  %v351 = vmax.f32 %v298, 0.0
  %v352 = vmax.f32 %v301, 0.0
  %v353 = vmax.f32 %v306, 0.0
  %v354 = vmax.f32 %v309, 0.0
  %v355 = vmax.f32 %v314, 0.0
  %v356 = vmax.f32 %v317, 0.0
  %v357 = vmax.f32 %v322, 0.0
  %v358 = vmax.f32 %v325, 0.0
  %v359 = vmax.f32 %v330, 0.0
  %v360 = vpack.c.bf16 %v336, %v335
  %v361 = vpack.c.bf16 %v338, %v337
  %v362 = vpack.c.bf16 %v340, %v339
  %v363 = vpack.c.bf16 %v342, %v341
  %v364 = vpack.c.bf16 %v344, %v343
  %v365 = vpack.c.bf16 %v346, %v345
  %v366 = vpack.c.bf16 %v348, %v347
  %v367 = vpack.c.bf16 %v350, %v349
  %v368 = vpack.c.bf16 %v352, %v351
  %v369 = vpack.c.bf16 %v354, %v353
  %v370 = vpack.c.bf16 %v356, %v355
  %v371 = vpack.c.bf16 %v358, %v357
  %v372 = vpack.c.bf16 %v359, %v359
  %v373 = vld [vmem:[%s3] sm:$0xf]
  %v374 = vld [vmem:[%s3 + $0x4] sm:$0xf]
  %v375 = vld [vmem:[%s3 + $0x8] sm:$0xf]
  %v376 = vld [vmem:[%s3 + $0xc] sm:$0xf]
  %v377 = vld [vmem:[%s3 + $0x10] sm:$0xf]
  %v378 = vld [vmem:[%s3 + $0x14] sm:$0xf]
  %v379 = vld [vmem:[%s3 + $0x18] sm:$0xf]
  %v380 = vld [vmem:[%s3 + $0x1c] sm:$0xf]
  %v381 = vld [vmem:[%s3 + $0x20] sm:$0xf]
  %v382 = vld [vmem:[%s3 + $0x24] sm:$0xf]
  %v383 = vld [vmem:[%s3 + $0x28] sm:$0xf]
  %v384 = vld [vmem:[%s3 + $0x2c] sm:$0xf]
  %v385 = vld [vmem:[%s3 + $0x30] sm:$0xf]
  %v386 = vld [vmem:[%s3 + $0x34] sm:$0xf]
  %v387 = vld [vmem:[%s3 + $0x38] sm:$0xf]
  %v388 = vld [vmem:[%s3 + $0x3c] sm:$0xf]
  %v389 = vld [vmem:[%s4] sm:$0x1]
  %v391 = vlaneseq
  %v392 = vshrl.u32 %v391, 7
  %v393 = vsub.s32 0, %v392
  %v394 = vrot.slane %v389, %v393
  %v412 = vunpack.c.l.b16 %v373
  %v413 = vunpack.c.l.b16 %v374
  %v414 = vunpack.c.l.b16 %v375
  %v415 = vunpack.c.l.b16 %v376
  %v416 = vunpack.c.l.b16 %v377
  %v417 = vunpack.c.l.b16 %v378
  %v418 = vunpack.c.l.b16 %v379
  %v419 = vunpack.c.l.b16 %v380
  %v420 = vunpack.c.l.b16 %v381
  %v421 = vunpack.c.l.b16 %v382
  %v422 = vunpack.c.l.b16 %v383
  %v423 = vunpack.c.l.b16 %v384
  %v424 = vunpack.c.l.b16 %v385
  %v425 = vunpack.c.l.b16 %v386
  %v426 = vunpack.c.l.b16 %v387
  %v427 = vunpack.c.l.b16 %v388
  %v428 = vpack.c.b16 %v413, %v412
  %v429 = vpack.c.b16 %v415, %v414
  %v430 = vpack.c.b16 %v417, %v416
  %v431 = vpack.c.b16 %v419, %v418
  %v432 = vpack.c.b16 %v421, %v420
  %v433 = vpack.c.b16 %v423, %v422
  %v434 = vpack.c.b16 %v425, %v424
  %v435 = vpack.c.b16 %v427, %v426
  %444 = vmatprep.subr.bf16.mxu0 0
  %445 = vmatpush1.bf16.msra.mxu0 %v428
  %446 = vmatprep.subr.bf16.mxu0 0
  %447 = vmatpush1.bf16.msra.mxu0 %v429
  %448 = vmatprep.subr.bf16.mxu0 0
  %449 = vmatpush1.bf16.msra.mxu0 %v430
  %450 = vmatprep.subr.bf16.mxu0 0
  %451 = vmatpush1.bf16.msra.mxu0 %v431
  %452 = vmatprep.subr.bf16.mxu0 0
  %453 = vmatpush1.bf16.msra.mxu0 %v432
  %454 = vmatprep.subr.bf16.mxu0 0
  %455 = vmatpush1.bf16.msra.mxu0 %v433
  %456 = vmatprep.subr.bf16.mxu0 0
  %457 = vmatpush1.bf16.msra.mxu0 %v434
  %458 = vmatprep.subr.bf16.mxu0 0
  %459 = vmatpush1.bf16.msra.mxu0 %v435
  %460 = vmatprep.subr.bf16.mxu0 0
  %461 = vmatpush1.bf16.msra.mxu0 0
  %462 = vmatprep.subr.bf16.mxu0 0
  %463 = vmatpush1.bf16.msra.mxu0 0
  %464 = vmatprep.subr.bf16.mxu0 0
  %465 = vmatpush1.bf16.msra.mxu0 0
  %466 = vmatprep.subr.bf16.mxu0 0
  %467 = vmatpush1.bf16.msra.mxu0 0
  %468 = vmatprep.subr.bf16.mxu0 0
  %469 = vmatpush1.bf16.msra.mxu0 0
  %470 = vmatprep.subr.bf16.mxu0 0
  %471 = vmatpush1.bf16.msra.mxu0 0
  %472 = vmatprep.subr.bf16.mxu0 0
  %473 = vmatpush1.bf16.msra.mxu0 0
  %474 = vmatprep.subr.bf16.mxu0 0
  %475 = vmatpush1.bf16.msra.mxu0 0
  %476 = vmatprep.mubr.bf16.mxu0 0
  %477 = vmatmul.mubr.bf16.gmra.mrb[0].mxu0 %v360
  %v478 = vpop.f32.mrb[0].mxu0
  %v479 = vadd.f32 %v394, %v478
  %v480 = vpop.f32.mrb[0].mxu0
  %v481 = vpop.f32.mrb[0].mxu0
  %v482 = vadd.f32 %v394, %v481
  %v483 = vpop.f32.mrb[0].mxu0
  %484 = vmatprep.mubr.bf16.mxu0 0
  %485 = vmatmul.mubr.bf16.gmra.mrb[0].mxu0 %v361
  %v486 = vpop.f32.mrb[0].mxu0
  %v487 = vadd.f32 %v394, %v486
  %v488 = vpop.f32.mrb[0].mxu0
  %v489 = vpop.f32.mrb[0].mxu0
  %v490 = vadd.f32 %v394, %v489
  %v491 = vpop.f32.mrb[0].mxu0
  %492 = vmatprep.mubr.bf16.mxu0 0
  %493 = vmatmul.mubr.bf16.gmra.mrb[0].mxu0 %v362
  %v494 = vpop.f32.mrb[0].mxu0
  %v495 = vadd.f32 %v394, %v494
  %v496 = vpop.f32.mrb[0].mxu0
  %v497 = vpop.f32.mrb[0].mxu0
  %v498 = vadd.f32 %v394, %v497
  %v499 = vpop.f32.mrb[0].mxu0
  %500 = vmatprep.mubr.bf16.mxu0 0
  %501 = vmatmul.mubr.bf16.gmra.mrb[0].mxu0 %v363
  %v502 = vpop.f32.mrb[0].mxu0
  %v503 = vadd.f32 %v394, %v502
  %v504 = vpop.f32.mrb[0].mxu0
  %v505 = vpop.f32.mrb[0].mxu0
  %v506 = vadd.f32 %v394, %v505
  %v507 = vpop.f32.mrb[0].mxu0
  %508 = vmatprep.mubr.bf16.mxu0 0
  %509 = vmatmul.mubr.bf16.gmra.mrb[0].mxu0 %v364
  %v510 = vpop.f32.mrb[0].mxu0
  %v511 = vadd.f32 %v394, %v510
  %v512 = vpop.f32.mrb[0].mxu0
  %v513 = vpop.f32.mrb[0].mxu0
  %v514 = vadd.f32 %v394, %v513
  %v515 = vpop.f32.mrb[0].mxu0
  %516 = vmatprep.mubr.bf16.mxu0 0
  %517 = vmatmul.mubr.bf16.gmra.mrb[0].mxu0 %v365
  %v518 = vpop.f32.mrb[0].mxu0
  %v519 = vadd.f32 %v394, %v518
  %v520 = vpop.f32.mrb[0].mxu0
  %v521 = vpop.f32.mrb[0].mxu0
  %v522 = vadd.f32 %v394, %v521
  %v523 = vpop.f32.mrb[0].mxu0
  %524 = vmatprep.mubr.bf16.mxu0 0
  %525 = vmatmul.mubr.bf16.gmra.mrb[0].mxu0 %v366
  %v526 = vpop.f32.mrb[0].mxu0
  %v527 = vadd.f32 %v394, %v526
  %v528 = vpop.f32.mrb[0].mxu0
  %v529 = vpop.f32.mrb[0].mxu0
  %v530 = vadd.f32 %v394, %v529
  %v531 = vpop.f32.mrb[0].mxu0
  %532 = vmatprep.mubr.bf16.mxu0 0
  %533 = vmatmul.mubr.bf16.gmra.mrb[0].mxu0 %v367
  %v534 = vpop.f32.mrb[0].mxu0
  %v535 = vadd.f32 %v394, %v534
  %v536 = vpop.f32.mrb[0].mxu0
  %v537 = vpop.f32.mrb[0].mxu0
  %v538 = vadd.f32 %v394, %v537
  %v539 = vpop.f32.mrb[0].mxu0
  %540 = vmatprep.mubr.bf16.mxu0 0
  %541 = vmatmul.mubr.bf16.gmra.mrb[0].mxu0 %v368
  %v542 = vpop.f32.mrb[0].mxu0
  %v543 = vadd.f32 %v394, %v542
  %v544 = vpop.f32.mrb[0].mxu0
  %v545 = vpop.f32.mrb[0].mxu0
  %v546 = vadd.f32 %v394, %v545
  %v547 = vpop.f32.mrb[0].mxu0
  %548 = vmatprep.mubr.bf16.mxu0 0
  %549 = vmatmul.mubr.bf16.gmra.mrb[0].mxu0 %v369
  %v550 = vpop.f32.mrb[0].mxu0
  %v551 = vadd.f32 %v394, %v550
  %v552 = vpop.f32.mrb[0].mxu0
  %v553 = vpop.f32.mrb[0].mxu0
  %v554 = vadd.f32 %v394, %v553
  %v555 = vpop.f32.mrb[0].mxu0
  %556 = vmatprep.mubr.bf16.mxu0 0
  %557 = vmatmul.mubr.bf16.gmra.mrb[0].mxu0 %v370
  %v558 = vpop.f32.mrb[0].mxu0
  %v559 = vadd.f32 %v394, %v558
  %v560 = vpop.f32.mrb[0].mxu0
  %v561 = vpop.f32.mrb[0].mxu0
  %v562 = vadd.f32 %v394, %v561
  %v563 = vpop.f32.mrb[0].mxu0
  %564 = vmatprep.mubr.bf16.mxu0 0
  %565 = vmatmul.mubr.bf16.gmra.mrb[0].mxu0 %v371
  %v566 = vpop.f32.mrb[0].mxu0
  %v567 = vadd.f32 %v394, %v566
  %v568 = vpop.f32.mrb[0].mxu0
  %v569 = vpop.f32.mrb[0].mxu0
  %v570 = vadd.f32 %v394, %v569
  %v571 = vpop.f32.mrb[0].mxu0
  %572 = vmatprep.mubr.bf16.mxu0 0
  %573 = vmatmul.mubr.bf16.gmra.mrb[0].mxu0 %v372
  %v574 = vpop.f32.mrb[0].mxu0
  %v575 = vadd.f32 %v394, %v574
  %v576 = vpop.f32.mrb[0].mxu0
  %v577 = vpop.f32.mrb[0].mxu0
  %v578 = vpop.f32.mrb[0].mxu0
  %579 = vdwg.mxu0
  %v580 = vmax.f32 %v479, 0.0
  %v581 = vmax.f32 %v482, 0.0
  %v582 = vmax.f32 %v487, 0.0
  %v583 = vmax.f32 %v490, 0.0
  %v584 = vmax.f32 %v495, 0.0
  %v585 = vmax.f32 %v498, 0.0
  %v586 = vmax.f32 %v503, 0.0
  %v587 = vmax.f32 %v506, 0.0
  %v588 = vmax.f32 %v511, 0.0
  %v589 = vmax.f32 %v514, 0.0
  %v590 = vmax.f32 %v519, 0.0
  %v591 = vmax.f32 %v522, 0.0
  %v592 = vmax.f32 %v527, 0.0
  %v593 = vmax.f32 %v530, 0.0
  %v594 = vmax.f32 %v535, 0.0
  %v595 = vmax.f32 %v538, 0.0
  %v596 = vmax.f32 %v543, 0.0
  %v597 = vmax.f32 %v546, 0.0
  %v598 = vmax.f32 %v551, 0.0
  %v599 = vmax.f32 %v554, 0.0
  %v600 = vmax.f32 %v559, 0.0
  %v601 = vmax.f32 %v562, 0.0
  %v602 = vmax.f32 %v567, 0.0
  %v603 = vmax.f32 %v570, 0.0
  %v604 = vmax.f32 %v575, 0.0
  %v605 = vpack.c.bf16 %v581, %v580
  %v606 = vpack.c.bf16 %v583, %v582
  %v607 = vpack.c.bf16 %v585, %v584
  %v608 = vpack.c.bf16 %v587, %v586
  %v609 = vpack.c.bf16 %v589, %v588
  %v610 = vpack.c.bf16 %v591, %v590
  %v611 = vpack.c.bf16 %v593, %v592
  %v612 = vpack.c.bf16 %v595, %v594
  %v613 = vpack.c.bf16 %v597, %v596
  %v614 = vpack.c.bf16 %v599, %v598
  %v615 = vpack.c.bf16 %v601, %v600
  %v616 = vpack.c.bf16 %v603, %v602
  %v617 = vpack.c.bf16 %v604, %v604
  %v618 = vld [vmem:[%s5] sm:$0xf]
  %v619 = vld [vmem:[%s5 + $0x4] sm:$0xf]
  %v620 = vld [vmem:[%s5 + $0x8] sm:$0xf]
  %v621 = vld [vmem:[%s5 + $0xc] sm:$0xf]
  %v622 = vld [vmem:[%s5 + $0x10] sm:$0xf]
  %v623 = vld [vmem:[%s5 + $0x14] sm:$0xf]
  %v624 = vld [vmem:[%s5 + $0x18] sm:$0xf]
  %v625 = vld [vmem:[%s5 + $0x1c] sm:$0xf]
  %v626 = vld [vmem:[%s5 + $0x20] sm:$0xf]
  %v627 = vld [vmem:[%s5 + $0x24] sm:$0xf]
  %v628 = vld [vmem:[%s5 + $0x28] sm:$0xf]
  %v629 = vld [vmem:[%s5 + $0x2c] sm:$0xf]
  %v630 = vld [vmem:[%s5 + $0x30] sm:$0xf]
  %v631 = vld [vmem:[%s5 + $0x34] sm:$0xf]
  %v632 = vld [vmem:[%s5 + $0x38] sm:$0xf]
  %v633 = vld [vmem:[%s5 + $0x3c] sm:$0xf]
  %v634 = vld [vmem:[%s6] sm:$0x1]
  %v636 = vlaneseq
  %v637 = vshrl.u32 %v636, 7
  %v638 = vsub.s32 0, %v637
  %v639 = vrot.slane %v634, %v638
  %v657 = vunpack.c.l.b16 %v618
  %v658 = vunpack.c.l.b16 %v619
  %v659 = vunpack.c.l.b16 %v620
  %v660 = vunpack.c.l.b16 %v621
  %v661 = vunpack.c.l.b16 %v622
  %v662 = vunpack.c.l.b16 %v623
  %v663 = vunpack.c.l.b16 %v624
  %v664 = vunpack.c.l.b16 %v625
  %v665 = vunpack.c.l.b16 %v626
  %v666 = vunpack.c.l.b16 %v627
  %v667 = vunpack.c.l.b16 %v628
  %v668 = vunpack.c.l.b16 %v629
  %v669 = vunpack.c.l.b16 %v630
  %v670 = vunpack.c.l.b16 %v631
  %v671 = vunpack.c.l.b16 %v632
  %v672 = vunpack.c.l.b16 %v633
  %v673 = vpack.c.b16 %v658, %v657
  %v674 = vpack.c.b16 %v660, %v659
  %v675 = vpack.c.b16 %v662, %v661
  %v676 = vpack.c.b16 %v664, %v663
  %v677 = vpack.c.b16 %v666, %v665
  %v678 = vpack.c.b16 %v668, %v667
  %v679 = vpack.c.b16 %v670, %v669
  %v680 = vpack.c.b16 %v672, %v671
  %689 = vmatprep.subr.bf16.mxu0 0
  %690 = vmatpush1.bf16.msra.mxu0 %v673
  %691 = vmatprep.subr.bf16.mxu0 0
  %692 = vmatpush1.bf16.msra.mxu0 %v674
  %693 = vmatprep.subr.bf16.mxu0 0
  %694 = vmatpush1.bf16.msra.mxu0 %v675
  %695 = vmatprep.subr.bf16.mxu0 0
  %696 = vmatpush1.bf16.msra.mxu0 %v676
  %697 = vmatprep.subr.bf16.mxu0 0
  %698 = vmatpush1.bf16.msra.mxu0 %v677
  %699 = vmatprep.subr.bf16.mxu0 0
  %700 = vmatpush1.bf16.msra.mxu0 %v678
  %701 = vmatprep.subr.bf16.mxu0 0
  %702 = vmatpush1.bf16.msra.mxu0 %v679
  %703 = vmatprep.subr.bf16.mxu0 0
  %704 = vmatpush1.bf16.msra.mxu0 %v680
  %705 = vmatprep.subr.bf16.mxu0 0
  %706 = vmatpush1.bf16.msra.mxu0 0
  %707 = vmatprep.subr.bf16.mxu0 0
  %708 = vmatpush1.bf16.msra.mxu0 0
  %709 = vmatprep.subr.bf16.mxu0 0
  %710 = vmatpush1.bf16.msra.mxu0 0
  %711 = vmatprep.subr.bf16.mxu0 0
  %712 = vmatpush1.bf16.msra.mxu0 0
  %713 = vmatprep.subr.bf16.mxu0 0
  %714 = vmatpush1.bf16.msra.mxu0 0
  %715 = vmatprep.subr.bf16.mxu0 0
  %716 = vmatpush1.bf16.msra.mxu0 0
  %717 = vmatprep.subr.bf16.mxu0 0
  %718 = vmatpush1.bf16.msra.mxu0 0
  %719 = vmatprep.subr.bf16.mxu0 0
  %720 = vmatpush1.bf16.msra.mxu0 0
  %721 = vmatprep.mubr.bf16.mxu0 0
  %722 = vmatmul.mubr.bf16.gmra.mrb[0].mxu0 %v605
  %v723 = vpop.f32.mrb[0].mxu0
  %v724 = vadd.f32 %v639, %v723
  %v725 = vpop.f32.mrb[0].mxu0
  %v726 = vpop.f32.mrb[0].mxu0
  %v727 = vadd.f32 %v639, %v726
  %v728 = vpop.f32.mrb[0].mxu0
  %729 = vmatprep.mubr.bf16.mxu0 0
  %730 = vmatmul.mubr.bf16.gmra.mrb[0].mxu0 %v606
  %v731 = vpop.f32.mrb[0].mxu0
  %v732 = vadd.f32 %v639, %v731
  %v733 = vpop.f32.mrb[0].mxu0
  %v734 = vpop.f32.mrb[0].mxu0
  %v735 = vadd.f32 %v639, %v734
  %v736 = vpop.f32.mrb[0].mxu0
  %737 = vmatprep.mubr.bf16.mxu0 0
  %738 = vmatmul.mubr.bf16.gmra.mrb[0].mxu0 %v607
  %v739 = vpop.f32.mrb[0].mxu0
  %v740 = vadd.f32 %v639, %v739
  %v741 = vpop.f32.mrb[0].mxu0
  %v742 = vpop.f32.mrb[0].mxu0
  %v743 = vadd.f32 %v639, %v742
  %v744 = vpop.f32.mrb[0].mxu0
  %745 = vmatprep.mubr.bf16.mxu0 0
  %746 = vmatmul.mubr.bf16.gmra.mrb[0].mxu0 %v608
  %v747 = vpop.f32.mrb[0].mxu0
  %v748 = vadd.f32 %v639, %v747
  %v749 = vpop.f32.mrb[0].mxu0
  %v750 = vpop.f32.mrb[0].mxu0
  %v751 = vadd.f32 %v639, %v750
  %v752 = vpop.f32.mrb[0].mxu0
  %753 = vmatprep.mubr.bf16.mxu0 0
  %754 = vmatmul.mubr.bf16.gmra.mrb[0].mxu0 %v609
  %v755 = vpop.f32.mrb[0].mxu0
  %v756 = vadd.f32 %v639, %v755
  %v757 = vpop.f32.mrb[0].mxu0
  %v758 = vpop.f32.mrb[0].mxu0
  %v759 = vadd.f32 %v639, %v758
  %v760 = vpop.f32.mrb[0].mxu0
  %761 = vmatprep.mubr.bf16.mxu0 0
  %762 = vmatmul.mubr.bf16.gmra.mrb[0].mxu0 %v610
  %v763 = vpop.f32.mrb[0].mxu0
  %v764 = vadd.f32 %v639, %v763
  %v765 = vpop.f32.mrb[0].mxu0
  %v766 = vpop.f32.mrb[0].mxu0
  %v767 = vadd.f32 %v639, %v766
  %v768 = vpop.f32.mrb[0].mxu0
  %769 = vmatprep.mubr.bf16.mxu0 0
  %770 = vmatmul.mubr.bf16.gmra.mrb[0].mxu0 %v611
  %v771 = vpop.f32.mrb[0].mxu0
  %v772 = vadd.f32 %v639, %v771
  %v773 = vpop.f32.mrb[0].mxu0
  %v774 = vpop.f32.mrb[0].mxu0
  %v775 = vadd.f32 %v639, %v774
  %v776 = vpop.f32.mrb[0].mxu0
  %777 = vmatprep.mubr.bf16.mxu0 0
  %778 = vmatmul.mubr.bf16.gmra.mrb[0].mxu0 %v612
  %v779 = vpop.f32.mrb[0].mxu0
  %v780 = vadd.f32 %v639, %v779
  %v781 = vpop.f32.mrb[0].mxu0
  %v782 = vpop.f32.mrb[0].mxu0
  %v783 = vadd.f32 %v639, %v782
  %v784 = vpop.f32.mrb[0].mxu0
  %785 = vmatprep.mubr.bf16.mxu0 0
  %786 = vmatmul.mubr.bf16.gmra.mrb[0].mxu0 %v613
  %v787 = vpop.f32.mrb[0].mxu0
  %v788 = vadd.f32 %v639, %v787
  %v789 = vpop.f32.mrb[0].mxu0
  %v790 = vpop.f32.mrb[0].mxu0
  %v791 = vadd.f32 %v639, %v790
  %v792 = vpop.f32.mrb[0].mxu0
  %793 = vmatprep.mubr.bf16.mxu0 0
  %794 = vmatmul.mubr.bf16.gmra.mrb[0].mxu0 %v614
  %v795 = vpop.f32.mrb[0].mxu0
  %v796 = vadd.f32 %v639, %v795
  %v797 = vpop.f32.mrb[0].mxu0
  %v798 = vpop.f32.mrb[0].mxu0
  %v799 = vadd.f32 %v639, %v798
  %v800 = vpop.f32.mrb[0].mxu0
  %801 = vmatprep.mubr.bf16.mxu0 0
  %802 = vmatmul.mubr.bf16.gmra.mrb[0].mxu0 %v615
  %v803 = vpop.f32.mrb[0].mxu0
  %v804 = vadd.f32 %v639, %v803
  %v805 = vpop.f32.mrb[0].mxu0
  %v806 = vpop.f32.mrb[0].mxu0
  %v807 = vadd.f32 %v639, %v806
  %v808 = vpop.f32.mrb[0].mxu0
  %809 = vmatprep.mubr.bf16.mxu0 0
  %810 = vmatmul.mubr.bf16.gmra.mrb[0].mxu0 %v616
  %v811 = vpop.f32.mrb[0].mxu0
  %v812 = vadd.f32 %v639, %v811
  %v813 = vpop.f32.mrb[0].mxu0
  %v814 = vpop.f32.mrb[0].mxu0
  %v815 = vadd.f32 %v639, %v814
  %v816 = vpop.f32.mrb[0].mxu0
  %817 = vmatprep.mubr.bf16.mxu0 0
  %818 = vmatmul.mubr.bf16.gmra.mrb[0].mxu0 %v617
  %v819 = vpop.f32.mrb[0].mxu0
  %v820 = vadd.f32 %v639, %v819
  %v821 = vpop.f32.mrb[0].mxu0
  %v822 = vpop.f32.mrb[0].mxu0
  %v823 = vpop.f32.mrb[0].mxu0
  %824 = vdwg.mxu0
  %825 = vst [vmem:[%s7] sm:$0xff] %v724
  %826 = vst [vmem:[%s7 + $0x8] sm:$0xff] %v727
  %827 = vst [vmem:[%s7 + $0x10] sm:$0xff] %v732
  %828 = vst [vmem:[%s7 + $0x18] sm:$0xff] %v735
  %829 = vst [vmem:[%s7 + $0x20] sm:$0xff] %v740
  %830 = vst [vmem:[%s7 + $0x28] sm:$0xff] %v743
  %831 = vst [vmem:[%s7 + $0x30] sm:$0xff] %v748
  %832 = vst [vmem:[%s7 + $0x38] sm:$0xff] %v751
  %833 = vst [vmem:[%s7 + $0x40] sm:$0xff] %v756
  %834 = vst [vmem:[%s7 + $0x48] sm:$0xff] %v759
  %835 = vst [vmem:[%s7 + $0x50] sm:$0xff] %v764
  %836 = vst [vmem:[%s7 + $0x58] sm:$0xff] %v767
  %837 = vst [vmem:[%s7 + $0x60] sm:$0xff] %v772
  %838 = vst [vmem:[%s7 + $0x68] sm:$0xff] %v775
  %839 = vst [vmem:[%s7 + $0x70] sm:$0xff] %v780
  %840 = vst [vmem:[%s7 + $0x78] sm:$0xff] %v783
  %841 = vst [vmem:[%s7 + $0x80] sm:$0xff] %v788
  %842 = vst [vmem:[%s7 + $0x88] sm:$0xff] %v791
  %843 = vst [vmem:[%s7 + $0x90] sm:$0xff] %v796
  %844 = vst [vmem:[%s7 + $0x98] sm:$0xff] %v799
  %845 = vst [vmem:[%s7 + $0xa0] sm:$0xff] %v804
  %846 = vst [vmem:[%s7 + $0xa8] sm:$0xff] %v807
  %847 = vst [vmem:[%s7 + $0xb0] sm:$0xff] %v812
  %848 = vst [vmem:[%s7 + $0xb8] sm:$0xff] %v815
  %849 = vst [vmem:[%s7 + $0xc0] sm:$0xff] %v820
  // Predicated region
  $region30: #{my_mlp_forward.1} parent=0 // pred_check
    _
  $region31: #{my_mlp_forward.1} parent=0 // pred_check_branch
    %851 = sbr.rel (0) target = $region33
  $region32: #{my_mlp_forward.1} parent=0 // pred_region
    _
  $region33: #{my_mlp_forward.1} parent=0 // pred_fallthru
    _
  // Predicated region
  $region34: #{my_mlp_forward.1} parent=0 // pred_check
    _
  $region35: #{my_mlp_forward.1} parent=0 // pred_check_branch
    %853 = sbr.rel (0) target = $region37
  $region36: #{my_mlp_forward.1} parent=0 // pred_region
    _
  $region37: #{my_mlp_forward.1} parent=0 // pred_fallthru
    _

</llo_original>
